<compile_context>
chip_gen: v5e
topology: v5e:2x2
jax: 0.10.0
libtpu: 0.0.40
codegen_flags: <defaults>
</compile_context>

<pallas_src>
import math

import jax
import jax.numpy as jnp
from jax.experimental import pallas as pl
from jax.experimental.pallas import tpu as pltpu


# ---------------------------------------------------------------------------
# Kernels
# ---------------------------------------------------------------------------

def _make_folded_kernel(scale: float):
    """Lane-dense path.

    mask_ref : (T, P)  bf16  unscaled 0/1 per-point keep mask
    sel_ref  : (P, L)  bf16  constant selection matrix, sel[p, l] = (l//C == p)
    feat_ref : (T, L)  feats (P points of C channels folded per lane-row)
    out_ref  : (T, L)
    """
    scale = float(scale)

    def kernel(mask_ref, sel_ref, feat_ref, out_ref):
        # Expand per-point mask across its channel lanes (tiny bf16 MXU matmul
        # into an f32 accumulator; free for a memory-bound kernel).
        expanded = jnp.dot(mask_ref[...], sel_ref[...],
                           preferred_element_type=jnp.float32)      # (T, L) f32
        out_ref[...] = (feat_ref[...].astype(jnp.float32)
                        * (expanded * scale)).astype(out_ref.dtype)

    return kernel


def _make_rowmask_kernel(scale: float):
    """Fallback path: per-point mask (T, 1) broadcast-multiplied into (T, C)."""
    scale = float(scale)

    def kernel(mask_ref, feat_ref, out_ref):
        m = mask_ref[...].astype(jnp.float32) * scale                # (T, 1) f32
        out_ref[...] = (feat_ref[...].astype(jnp.float32) * m).astype(out_ref.dtype)

    return kernel


# ---------------------------------------------------------------------------
# Tiling / dispatch
# ---------------------------------------------------------------------------

def _pick_tile_rows(n_rows: int, row_elems: int, itemsize: int,
                    target_bytes: int = 2 << 20, cap: int = 8192,
                    min_steps: int = 4) -> int:
    """Row tile with ~target_bytes feature block, multiple of 8 rows.

    ~2 MiB blocks amortize the ~0.35 us per-grid-step overhead while keeping
    the double-buffered in+out working set (~8-9 MiB) comfortably inside every
    generation's VMEM.  The tile is additionally clamped so the grid has at
    least ~min_steps steps (when there is enough work), so v7x's two
    TensorCores both get blocks.
    """
    rows = target_bytes // max(1, row_elems * itemsize)
    rows = int(max(8, min(rows, cap)))
    rows -= rows % 8
    if n_rows > 8:
        per_step = -(-n_rows // min_steps)                 # cdiv
        per_step = max(8, ((per_step + 7) // 8) * 8)       # round up to 8 rows
        rows = min(rows, per_step)
    if rows >= n_rows:
        return int(n_rows)        # full extent (always a legal block dim)
    return int(rows)


def _vmem_limit(block_bytes: int) -> int:
    """Explicit scoped-VMEM budget for the double-buffered working set."""
    need = int(2 * block_bytes * 1.5) + (4 << 20)
    # Floor at 32 MiB (lifts v5e's 16 MiB scoped default), cap at 48 MiB so we
    # stay well inside v7x's 64 MiB physical VMEM.
    return int(min(max(need, 32 << 20), 48 << 20))


def _apply_mask(feats: jax.Array, row_mask: jax.Array, scale: float) -> jax.Array:
    """out[n, c] = feats[n, c] * row_mask[n] * scale, via Pallas."""
    N, C = feats.shape
    dt = feats.dtype
    itemsize = jnp.dtype(dt).itemsize

    g = math.gcd(C, 128)
    P = 128 // g          # points folded per lane-row
    L = P * C             # lcm(C, 128): lane-dense row width (multiple of 128)
    sel_bytes = P * L * 2  # bf16 selection matrix

    if C % 128 != 0 and sel_bytes <= (1 << 20):
        # --- Lane-dense folded path (any C with a reasonable lcm) -----------
        pad = (-N) % P
        if pad:
            # At most P-1 dummy rows so the (N, C) -> (N/P, L) fold is exact.
            feats = jnp.pad(feats, ((0, pad), (0, 0)))
            row_mask = jnp.pad(row_mask, ((0, pad),))
        Np = N + pad
        R = Np // P
        feats_f = feats.reshape(R, L)          # free view (row-major contiguous)
        mask_f = row_mask.reshape(R, P)        # bf16, tiny

        # Selection matrix built ONCE here (hoisted out of the kernel body):
        # sel[p, l] = 1 iff lane l belongs to folded point p.
        sel = (jnp.arange(P, dtype=jnp.int32)[:, None]
               == (jnp.arange(L, dtype=jnp.int32)[None, :] // C)
               ).astype(jnp.bfloat16)

        tile_r = _pick_tile_rows(R, L, itemsize)
        grid = (pl.cdiv(R, tile_r),)
        block_bytes = 2 * tile_r * L * itemsize + tile_r * P * 2 + sel_bytes

        out = pl.pallas_call(
            _make_folded_kernel(scale),
            out_shape=jax.ShapeDtypeStruct((R, L), dt),
            grid_spec=pltpu.PrefetchScalarGridSpec(
                num_scalar_prefetch=0,
                grid=grid,
                in_specs=[
                    pl.BlockSpec((tile_r, P), lambda i: (i, 0)),   # mask
                    pl.BlockSpec((P, L), lambda i: (0, 0)),        # resident sel
                    pl.BlockSpec((tile_r, L), lambda i: (i, 0)),   # feats
                ],
                out_specs=pl.BlockSpec((tile_r, L), lambda i: (i, 0)),
            ),
            compiler_params=pltpu.CompilerParams(
                dimension_semantics=("parallel",),
                vmem_limit_bytes=_vmem_limit(block_bytes)),
        )(mask_f, sel, feats_f)
        out = out.reshape(Np, C)
        return out[:N] if pad else out

    # --- Row-mask path: C % 128 == 0 (already lane-dense) or huge lcm -------
    mask2d = row_mask.reshape(N, 1)
    tile_n = _pick_tile_rows(N, C, itemsize)
    grid = (pl.cdiv(N, tile_n),)
    block_bytes = 2 * tile_n * C * itemsize + tile_n * 2
    return pl.pallas_call(
        _make_rowmask_kernel(scale),
        out_shape=jax.ShapeDtypeStruct((N, C), dt),
        grid_spec=pltpu.PrefetchScalarGridSpec(
            num_scalar_prefetch=0,
            grid=grid,
            in_specs=[
                pl.BlockSpec((tile_n, 1), lambda i: (i, 0)),   # mask
                pl.BlockSpec((tile_n, C), lambda i: (i, 0)),   # feats
            ],
            out_specs=pl.BlockSpec((tile_n, C), lambda i: (i, 0)),
        ),
        compiler_params=pltpu.CompilerParams(
            dimension_semantics=("parallel",),
            vmem_limit_bytes=_vmem_limit(block_bytes)),
    )(mask2d, feats)


# ---------------------------------------------------------------------------
# Public entry point (matches MinkowskiDropPath.forward semantics)
# ---------------------------------------------------------------------------

def minkowski_drop_path(
    feats: jax.Array,          # [N, C] point features (sparse-tensor F)
    batch_ids: jax.Array,      # [N] int32, which batch sample each point is in
    num_batches: int,
    *,
    drop_prob: float = 0.0,
    scale_by_keep: bool = True,
    training: bool = True,
    key: jax.Array | None = None,
):
    # Eval mode, and the degenerate drop_prob == 0 case, are identities:
    # skip the full read+write HBM pass entirely.
    if not training or drop_prob <= 0.0:
        return feats

    assert key is not None, "a PRNG key is required in training mode"
    keep_prob = 1.0 - drop_prob

    # Per-batch random keep decision (torch: random.uniform(0,1) > drop_prob).
    u = jax.random.uniform(key, (num_batches,), dtype=jnp.float32)
    bmask = (u > drop_prob).astype(jnp.bfloat16)     # unscaled 0/1, exact in bf16

    # 1/keep_prob applied as a compile-time f32 scalar inside the kernel
    # (stays exact even when features are bf16). drop_prob == 1.0 => scale 1,
    # mask all zeros (matches timm/torch: output is all zeros).
    scale = (1.0 / keep_prob) if (keep_prob > 0.0 and scale_by_keep) else 1.0

    # Hoisted gather: per-point mask (cheap O(N) XLA gather in bf16; keeps the
    # Pallas kernel a pure HBM-roofline multiply).  jnp.take clamps
    # out-of-range batch ids rather than silently zeroing points.
    # TODO(synk): if batch_ids are guaranteed sorted, scalar-prefetch bmask +
    # per-batch row offsets (PrefetchScalarGridSpec) and rebuild the per-point
    # mask in-kernel to drop this extra N-element HBM round-trip.
    row_mask = jnp.take(bmask, batch_ids.astype(jnp.int32), axis=0)   # (N,) bf16

    return _apply_mask(feats, row_mask, scale)


# ---------------------------------------------------------------------------
# Demo / correctness check
# ---------------------------------------------------------------------------

if __name__ == "__main__":
    key = jax.random.PRNGKey(0)
    k_feat, k_drop = jax.random.split(key)

    # Small sparse tensor: 2 batch samples, 32 points each.
    B = 2
    points_per_sample = 32
    N = B * points_per_sample
    batch_ids = jnp.repeat(jnp.arange(B, dtype=jnp.int32), points_per_sample)

    drop_prob = 0.5
    u = jax.random.uniform(k_drop, (B,), dtype=jnp.float32)
    keep = (u > drop_prob).astype(jnp.float32) / (1.0 - drop_prob)

    # 1) Folded lane-dense path, C = 32 (P = 4, L = 128).
    C = 32
    feats = jax.random.normal(k_feat, (N, C), dtype=jnp.float32)
    out = jax.block_until_ready(minkowski_drop_path(
        feats, batch_ids, num_batches=B, drop_prob=drop_prob,
        scale_by_keep=True, training=True, key=k_drop))
    ref = feats * keep[batch_ids][:, None]
    assert out.shape == feats.shape
    assert jnp.allclose(out, ref, atol=1e-6), "mismatch (folded C=32)"

    # 2) Folded LCM path, C = 96 (P = 4, L = 384).
    C2 = 96
    feats2 = jax.random.normal(k_feat, (N, C2), dtype=jnp.float32)
    out2 = jax.block_until_ready(minkowski_drop_path(
        feats2, batch_ids, num_batches=B, drop_prob=drop_prob,
        training=True, key=k_drop))
    ref2 = feats2 * keep[batch_ids][:, None]
    assert jnp.allclose(out2, ref2, atol=1e-6), "mismatch (folded C=96)"

    # 3) Folded path with row padding: N not a multiple of P.
    pps3 = 33
    N3 = B * pps3
    batch_ids3 = jnp.repeat(jnp.arange(B, dtype=jnp.int32), pps3)
    feats3 = jax.random.normal(k_feat, (N3, 32), dtype=jnp.float32)
    out3 = jax.block_until_ready(minkowski_drop_path(
        feats3, batch_ids3, num_batches=B, drop_prob=drop_prob,
        training=True, key=k_drop))
    ref3 = feats3 * keep[batch_ids3][:, None]
    assert out3.shape == feats3.shape
    assert jnp.allclose(out3, ref3, atol=1e-6), "mismatch (padded fold)"

    # 4) Row-mask path: C a multiple of 128.
    C4 = 256
    feats4 = jax.random.normal(k_feat, (N, C4), dtype=jnp.float32)
    out4 = jax.block_until_ready(minkowski_drop_path(
        feats4, batch_ids, num_batches=B, drop_prob=drop_prob,
        training=True, key=k_drop))
    ref4 = feats4 * keep[batch_ids][:, None]
    assert jnp.allclose(out4, ref4, atol=1e-6), "mismatch (rowmask C=256)"

    # 5) drop_prob == 1.0 with scale_by_keep: all zeros, no scaling (timm).
    out5 = jax.block_until_ready(minkowski_drop_path(
        feats, batch_ids, num_batches=B, drop_prob=1.0,
        scale_by_keep=True, training=True, key=k_drop))
    assert jnp.allclose(out5, jnp.zeros_like(feats)), "mismatch (drop_prob=1)"

    # 6) Eval mode / drop_prob == 0 are identities (no kernel launch).
    out_eval = minkowski_drop_path(
        feats, batch_ids, num_batches=B, drop_prob=drop_prob,
        training=False, key=k_drop)
    assert jnp.allclose(out_eval, feats)
    out_p0 = minkowski_drop_path(
        feats, batch_ids, num_batches=B, drop_prob=0.0,
        training=True, key=k_drop)
    assert jnp.allclose(out_p0, feats)

    print("KERNEL_OK")
</pallas_src>

<mosaic_0001>
module attributes {stable_mosaic.version = 11 : i64} {
  func.func @kernel(%arg0: i32, %arg1: memref<8x4xbf16, #tpu.memory_space<vmem>>, %arg2: memref<4x128xbf16, #tpu.memory_space<vmem>>, %arg3: memref<8x128xf32, #tpu.memory_space<vmem>>, %arg4: memref<8x128xf32, #tpu.memory_space<vmem>>) attributes {dimension_semantics = [#tpu.dimension_semantics<parallel>], iteration_bounds = array<i64: 2>, scalar_prefetch = 0 : i64, scratch_operands = 0 : i64, tpu.core_type = #tpu.core_type<tc>, window_params = [{transform_indices = @transform_0, window_bounds = array<i64: 8, 4>}, {pipeline_mode = #tpu.pipeline_mode<synchronous>, transform_indices = @transform_1, window_bounds = array<i64: 4, 128>}, {transform_indices = @transform_2, window_bounds = array<i64: 8, 128>}, {transform_indices = @transform_3, window_bounds = array<i64: 8, 128>}]} {
    %c0 = arith.constant 0 : index
    %c0_0 = arith.constant 0 : index
    %0 = vector.load %arg1[%c0, %c0_0] : memref<8x4xbf16, #tpu.memory_space<vmem>>, vector<8x4xbf16>
    %c0_1 = arith.constant 0 : index
    %c0_2 = arith.constant 0 : index
    %1 = vector.load %arg2[%c0_1, %c0_2] : memref<4x128xbf16, #tpu.memory_space<vmem>>, vector<4x128xbf16>
    %cst = arith.constant dense<0.000000e+00> : vector<8x128xf32>
    %2 = tpu.matmul %0, %1, %cst {dimension_numbers = #tpu.dot_dimension_numbers<[1], [0], [0], [1], [0, 0, 1, 1], [], []>} : vector<8x4xbf16>, vector<4x128xbf16>, vector<8x128xf32> -> vector<8x128xf32>
    %c0_3 = arith.constant 0 : index
    %c0_4 = arith.constant 0 : index
    %3 = vector.load %arg3[%c0_3, %c0_4] : memref<8x128xf32, #tpu.memory_space<vmem>>, vector<8x128xf32>
    %cst_5 = arith.constant 2.000000e+00 : f32
    %4 = vector.broadcast %cst_5 : f32 to vector<8x128xf32>
    %5 = arith.mulf %2, %4 : vector<8x128xf32>
    %6 = arith.mulf %3, %5 : vector<8x128xf32>
    %c0_6 = arith.constant 0 : index
    %c0_7 = arith.constant 0 : index
    %7 = vector.load %arg4[%c0_6, %c0_7] : memref<8x128xf32, #tpu.memory_space<vmem>>, vector<8x128xf32>
    tpu.vector_store %arg4[%c0_6, %c0_7], %6 {strides = array<i32>} : memref<8x128xf32, #tpu.memory_space<vmem>>, vector<8x128xf32>,
    return
  }
  func.func @transform_0(%arg0: i32) -> (i32, i32) {
    %c0_i32 = arith.constant 0 : i32
    %c0_i32_0 = arith.constant 0 : i32
    return %arg0, %c0_i32 : i32, i32
  }
  func.func @transform_1(%arg0: i32) -> (i32, i32) {
    %c0_i32 = arith.constant 0 : i32
    %c0_i32_0 = arith.constant 0 : i32
    %c0_i32_1 = arith.constant 0 : i32
    return %c0_i32, %c0_i32_0 : i32, i32
  }
  func.func @transform_2(%arg0: i32) -> (i32, i32) {
    %c0_i32 = arith.constant 0 : i32
    %c0_i32_0 = arith.constant 0 : i32
    return %arg0, %c0_i32 : i32, i32
  }
  func.func @transform_3(%arg0: i32) -> (i32, i32) {
    %c0_i32 = arith.constant 0 : i32
    %c0_i32_0 = arith.constant 0 : i32
    return %arg0, %c0_i32 : i32, i32
  }
}

</mosaic_0001>

<llo_original>
// kernel: tpu_custom_call.1
$region0: #{tpu_custom_call.1}
  #allocation0 [shape = 'u32[]', space=smem, size = 0x4, offset = 0x4, fixed_abs, tag = 'smem constant byte address 0x4 - core index']
  #allocation1 [shape = 'u32[72,128]{1,0:T(1,128)}', space=vmem, size = 0x9000, scoped, tag = 'internal scratch']
  %s0 = inlined_call_operand.vmem [shape: bf16[16,4], index: 0, kind: input, shape index: {}]
  %s1 = inlined_call_operand.vmem [shape: bf16[4,128], index: 1, kind: input, shape index: {}]
  %s2 = inlined_call_operand.hbm [shape: f32[16,128], index: 2, kind: input, shape index: {}]
  %s3 = inlined_call_operand.hbm [shape: f32[16,128], index: 3, kind: output, shape index: {}]
  %s4 = sld [smem:[#allocation0]]
  $region49: #{tpu_custom_call.1} parent=0
    _
  %s6 = ssub.s32 1, %s4
  %s7 = scalar_select 0, %s6, %s4
  $region1: #{tpu_custom_call.1} parent=0
    #allocation2 [shape = 'u8[8192]{0}', space=vmem, size = 0x2000, scoped, tag = 'input window, operand 2']
    #allocation3 [shape = 's32[2]{0}', space=sflag, size = 0x8, scoped, tag = 'scoped memory for tpu_custom_call.1']
    #allocation4 [shape = 's32[2]{0}', space=sflag, size = 0x8, scoped, tag = 'scoped memory for tpu_custom_call.1']
    #allocation5 [shape = 'u8[8192]{0}', space=vmem, size = 0x2000, scoped, tag = 'output window, operand 0']
    %8 = vsyncpa [#allocation3], 0
    %s9 = scalar_lea.sflag [#allocation3], 1
    %10 = vsyncpa %s9, 0
    %11 = vsyncpa [#allocation4], 0
    %s12 = scalar_lea.sflag [#allocation4], 1
    %13 = vsyncpa %s12, 0
    loop: start=0, step=1, limit=4
    $region2: #{tpu_custom_call.1} parent=1 // loop_pre_header
      _
    $region3: #{tpu_custom_call.1} parent=1 // loop_header
      %s15 = sphi 0, %s19
      %p16 = scmp.ge.s32.totalorder %s15, 4
      %s25 = sphi 0, %s27
      %s28 = sphi 0, %s25
      %s29 = sphi 0, %s28
      %s45 = sphi 0, %s29
      %s49 = sphi 0, %s49
      %s51 = sphi 0, %s49
      %s52 = sphi 0, %s51
      %s66 = sphi 0, %s52
      %s72 = sphi 0, %s74
      %s75 = sphi 0, %s72
      %s76 = sphi 0, %s75
      %s92 = sphi 0, %s76
      %s98 = sphi 0, %s100
      %s101 = sphi 0, %s98
      %s102 = sphi 0, %s101
      %s118 = sphi 0, %s102
    $region4: #{tpu_custom_call.1} parent=1 // loop_header_branch
      %18 = sbr.rel (%p16) target = $region8
    $region5: #{tpu_custom_call.1} parent=1 // loop_body
      %s20 = ssub.s32 %s15, 1
      %s21 = ssub.s32 %s15, 2
      %s22 = sadd.s32 %s15, 1
      %s23 = ssub.s32 %s15, %s22
      %p24 = scmp.eq.s32.totalorder %s23, 0
      %s26 = sadd.s32 %s25, 1
      %s27 = scalar_select %p24, %s25, %s26
      %p30 = pneg %p24
      %p31 = scmp.eq.s32.totalorder %s15, 1
      %p32 = por %p30, %p31
      %p33 = scmp.ne.s32.totalorder %s25, %s28
      %p34 = scmp.eq.s32.totalorder %s15, 0
      %p35 = por %p33, %p34
      %p36 = scmp.ne.s32.totalorder %s25, %s28
      %p37 = scmp.eq.s32.totalorder %s20, 1
      %p38 = por %p36, %p37
      %p39 = scmp.ne.s32.totalorder %s28, %s29
      %p40 = scmp.eq.s32.totalorder %s20, 0
      %p41 = por %p39, %p40
      %p42 = scmp.ne.s32.totalorder %s28, %s29
      %p43 = scmp.eq.s32.totalorder %s21, 1
      %p44 = por %p42, %p43
      %p46 = scmp.ne.s32.totalorder %s29, %s45
      %p47 = scmp.eq.s32.totalorder %s21, 0
      %p48 = por %p46, %p47
      %s50 = sadd.s32 %s49, 1
      %p53 = scmp.eq.s32.totalorder %s15, 1
      %p54 = scmp.ne.s32.totalorder %s49, %s51
      %p55 = scmp.eq.s32.totalorder %s15, 0
      %p56 = por %p54, %p55
      %p57 = scmp.ne.s32.totalorder %s49, %s51
      %p58 = scmp.eq.s32.totalorder %s20, 1
      %p59 = por %p57, %p58
      %p60 = scmp.ne.s32.totalorder %s51, %s52
      %p61 = scmp.eq.s32.totalorder %s20, 0
      %p62 = por %p60, %p61
      %p63 = scmp.ne.s32.totalorder %s51, %s52
      %p64 = scmp.eq.s32.totalorder %s21, 1
      %p65 = por %p63, %p64
      %p67 = scmp.ne.s32.totalorder %s52, %s66
      %p68 = scmp.eq.s32.totalorder %s21, 0
      %p69 = por %p67, %p68
      %s70 = ssub.s32 %s15, %s22
      %p71 = scmp.eq.s32.totalorder %s70, 0
      %s73 = sadd.s32 %s72, 1
      %s74 = scalar_select %p71, %s72, %s73
      %p77 = pneg %p71
      %p78 = scmp.eq.s32.totalorder %s15, 1
      %p79 = por %p77, %p78
      %p80 = scmp.ne.s32.totalorder %s72, %s75
      %p81 = scmp.eq.s32.totalorder %s15, 0
      %p82 = por %p80, %p81
      %p83 = scmp.ne.s32.totalorder %s72, %s75
      %p84 = scmp.eq.s32.totalorder %s20, 1
      %p85 = por %p83, %p84
      %p86 = scmp.ne.s32.totalorder %s75, %s76
      %p87 = scmp.eq.s32.totalorder %s20, 0
      %p88 = por %p86, %p87
      %p89 = scmp.ne.s32.totalorder %s75, %s76
      %p90 = scmp.eq.s32.totalorder %s21, 1
      %p91 = por %p89, %p90
      %p93 = scmp.ne.s32.totalorder %s76, %s92
      %p94 = scmp.eq.s32.totalorder %s21, 0
      %p95 = por %p93, %p94
      %s96 = ssub.s32 %s15, %s22
      %p97 = scmp.eq.s32.totalorder %s96, 0
      %s99 = sadd.s32 %s98, 1
      %s100 = scalar_select %p97, %s98, %s99
      %p103 = pneg %p97
      %p104 = scmp.eq.s32.totalorder %s15, 1
      %p105 = por %p103, %p104
      %p106 = scmp.ne.s32.totalorder %s98, %s101
      %p107 = scmp.eq.s32.totalorder %s15, 0
      %p108 = por %p106, %p107
      %p109 = scmp.ne.s32.totalorder %s98, %s101
      %p110 = scmp.eq.s32.totalorder %s20, 1
      %p111 = por %p109, %p110
      %p112 = scmp.ne.s32.totalorder %s101, %s102
      %p113 = scmp.eq.s32.totalorder %s20, 0
      %p114 = por %p112, %p113
      %p115 = scmp.ne.s32.totalorder %s101, %s102
      %p116 = scmp.eq.s32.totalorder %s21, 1
      %p117 = por %p115, %p116
      %p119 = scmp.ne.s32.totalorder %s102, %s118
      %p120 = scmp.eq.s32.totalorder %s21, 0
      %p121 = por %p119, %p120
      %p122 = scmp.le.s32.totalorder 1, %s15
      %p123 = scmp.lt.s32.totalorder %s15, 3
      %p124 = pnand %p122, %p123
      %p125 = pneg %p124
      // Predicated region
      $region9: #{tpu_custom_call.1} parent=5 // pred_check
        _
      $region10: #{tpu_custom_call.1} parent=5 // pred_check_branch
        %127 = sbr.rel (%p124) target = $region12
      $region11: #{tpu_custom_call.1} parent=5 // pred_region
        %s128 = ssub.s32 %s15, 1
        // Predicated region
        $region13: #{tpu_custom_call.1} parent=11 // pred_check
          %p129 = pneg %p62
        $region14: #{tpu_custom_call.1} parent=11 // pred_check_branch
          %131 = sbr.rel (%p129) target = $region16
        $region15: #{tpu_custom_call.1} parent=11 // pred_region
          _
        $region16: #{tpu_custom_call.1} parent=11 // pred_fallthru
          _
      $region12: #{tpu_custom_call.1} parent=5 // pred_fallthru
        _
      %p132 = scmp.lt.s32.totalorder %s15, 2
      // Predicated region
      $region17: #{tpu_custom_call.1} parent=5 // pred_check
        %p133 = pneg %p132
      $region18: #{tpu_custom_call.1} parent=5 // pred_check_branch
        %135 = sbr.rel (%p133) target = $region20
      $region19: #{tpu_custom_call.1} parent=5 // pred_region
        // Predicated region
        $region21: #{tpu_custom_call.1} parent=19 // pred_check
          %p136 = pneg %p35
        $region22: #{tpu_custom_call.1} parent=19 // pred_check_branch
          %138 = sbr.rel (%p136) target = $region24
        $region23: #{tpu_custom_call.1} parent=19 // pred_region
          %p139 = scmp.lt.s32.totalorder %s15, 1
          %s140 = scalar_select %p139, %s15, 1
          %s141 = smul.addr %s140, 4
          %s142 = scalar_lea.vmem %s0, %s141
        $region24: #{tpu_custom_call.1} parent=19 // pred_fallthru
          _
        // Predicated region
        $region25: #{tpu_custom_call.1} parent=19 // pred_check
          %p143 = pneg %p82
        $region26: #{tpu_custom_call.1} parent=19 // pred_check_branch
          %145 = sbr.rel (%p143) target = $region28
        $region27: #{tpu_custom_call.1} parent=19 // pred_region
          %s146 = sand.u32 %s72, 1
          %s147 = scalar_lea.sflag [#allocation3], %s146
          %s148 = sand.u32 %s72, 1
          %s149 = smul.addr %s148, 8
          %s150 = scalar_lea.vmem [#allocation2], %s149
          %152 = vsyncadd %s147, 0
          %s153 = smul.addr %s15, 8
          %s154 = scalar_lea.hbm %s2, %s153
          %s156 = sshll.u32 %s154, 4
          %s157 = int_to_ptr.hbm [resolvable:$true] %s156
          %s158 = sshll.u32 %s150, 4
          %s159 = int_to_ptr.vmem [resolvable:$true] %s158
          %161 = dma.hbm_to_vmem [thread:$0]  %s157, 128, %s159, %s147
        $region28: #{tpu_custom_call.1} parent=19 // pred_fallthru
          _
      $region20: #{tpu_custom_call.1} parent=5 // pred_fallthru
        _
      %p162 = scmp.le.s32.totalorder 1, %s15
      %p163 = scmp.lt.s32.totalorder %s15, 3
      %p164 = pnand %p162, %p163
      %p165 = pneg %p164
      // Predicated region
      $region29: #{tpu_custom_call.1} parent=5 // pred_check
        _
      $region30: #{tpu_custom_call.1} parent=5 // pred_check_branch
        %167 = sbr.rel (%p164) target = $region32
      $region31: #{tpu_custom_call.1} parent=5 // pred_region
        %s168 = ssub.s32 %s15, 1
        %s169 = sand.u32 %s75, 1
        %s170 = scalar_lea.sflag [#allocation3], %s169
        %s171 = sand.u32 %s75, 1
        %s172 = smul.addr %s171, 8
        %s173 = scalar_lea.vmem [#allocation2], %s172
        // Predicated region
        $region33: #{tpu_custom_call.1} parent=31 // pred_check
          %p174 = pneg %p88
        $region34: #{tpu_custom_call.1} parent=31 // pred_check_branch
          %176 = sbr.rel (%p174) target = $region36
        $region35: #{tpu_custom_call.1} parent=31 // pred_region
          %178 = dma.done %s170, 128
        $region36: #{tpu_custom_call.1} parent=31 // pred_fallthru
          _
        %p179 = scmp.lt.s32.totalorder %s20, 1
        %s180 = scalar_select %p179, %s20, 1
        %s181 = smul.addr %s180, 4
        %s182 = scalar_lea.vmem %s0, %s181
        %p183 = pneg %p41
        %p184 = pneg %p38
        %p185 = pneg %p62
        %p186 = pneg %p59
        %s187 = sand.u32 %s75, 1
        %s188 = scalar_lea.sflag [#allocation3], %s187
        %s189 = sand.u32 %s75, 1
        %s190 = smul.addr %s189, 8
        %s191 = scalar_lea.vmem [#allocation2], %s190
        %p192 = pneg %p88
        %p193 = pneg %p85
        %p194 = pneg %p114
        %p195 = pneg %p111
        %s196 = sand.u32 %s101, 1
        %s197 = scalar_lea.sflag [#allocation4], %s196
        %s198 = sand.u32 %s101, 1
        %s199 = smul.addr %s198, 8
        %s200 = scalar_lea.vmem [#allocation5], %s199
        %p201 = scmp.lt.s32.totalorder %s20, 1
        %s202 = scalar_select %p201, %s20, 1
        %s203 = smul.addr %s202, 4
        %s204 = scalar_lea.vmem %s0, %s203
        %v206 = vld [vmem:[%s204] sm:$0xf]
        %v207 = vld [vmem:[%s1] sm:$0x3]
        %vm208 = vcmask 31744
        %v210 = vsel %vm208, %v206, 0
        %vm212 = vcmask 1041408
        %v214 = vsel %vm212, %v207, 0
        %216 = vmatpush.bf16.msra.mxu0 0
        %217 = vmatpush.bf16.msra.mxu0 0
        %218 = vmatpush.bf16.msra.mxu0 0
        %219 = vmatpush.bf16.msra.mxu0 0
        %220 = vmatpush.bf16.msra.mxu0 0
        %221 = vmatpush.bf16.msra.mxu0 0
        %222 = vmatpush.bf16.msra.mxu0 0
        %223 = vmatpush.bf16.msra.mxu0 %v214
        %224 = vmatmul.bf16.gmra.mxu0 %v210
        %v225 = vpop.f32.mrf.mxu0
        %v226 = vadd.f32 0.0, %v225
        %v227 = vpop.f32.mrf.mxu0
        %228 = vdwg.mxu0
        %v229 = vld [vmem:[%s173] sm:$0xff]
        %v230 = vmul.f32 %v226, 2.0
        %v231 = vmul.f32 %v229, %v230
        %232 = vst [vmem:[%s200] sm:$0xff] %v231
        %s233 = sand.u32 %s101, 1
        %s234 = scalar_lea.sflag [#allocation4], %s233
        %s235 = sand.u32 %s101, 1
        %s236 = smul.addr %s235, 8
        %s237 = scalar_lea.vmem [#allocation5], %s236
        // Predicated region
        $region37: #{tpu_custom_call.1} parent=31 // pred_check
          %p238 = pneg %p111
        $region38: #{tpu_custom_call.1} parent=31 // pred_check_branch
          %240 = sbr.rel (%p238) target = $region40
        $region39: #{tpu_custom_call.1} parent=31 // pred_region
          %242 = vsyncadd %s234, 0
          %s243 = smul.addr %s20, 8
          %s244 = scalar_lea.hbm %s3, %s243
          %s246 = sshll.u32 %s237, 4
          %s247 = int_to_ptr.vmem [resolvable:$true] %s246
          %s248 = sshll.u32 %s244, 4
          %s249 = int_to_ptr.hbm [resolvable:$true] %s248
          %251 = dma.vmem_to_hbm [thread:$0]  %s247, 128, %s249, %s234
        $region40: #{tpu_custom_call.1} parent=31 // pred_fallthru
          _
      $region32: #{tpu_custom_call.1} parent=5 // pred_fallthru
        _
      %p252 = scmp.le.s32.totalorder 2, %s15
      // Predicated region
      $region41: #{tpu_custom_call.1} parent=5 // pred_check
        %p253 = pneg %p252
      $region42: #{tpu_custom_call.1} parent=5 // pred_check_branch
        %255 = sbr.rel (%p253) target = $region44
      $region43: #{tpu_custom_call.1} parent=5 // pred_region
        %s256 = ssub.s32 %s15, 2
        // Predicated region
        $region45: #{tpu_custom_call.1} parent=43 // pred_check
          %p257 = pneg %p117
        $region46: #{tpu_custom_call.1} parent=43 // pred_check_branch
          %259 = sbr.rel (%p257) target = $region48
        $region47: #{tpu_custom_call.1} parent=43 // pred_region
          %s260 = sand.u32 %s102, 1
          %s261 = scalar_lea.sflag [#allocation4], %s260
          %s262 = sand.u32 %s102, 1
          %s263 = smul.addr %s262, 8
          %s264 = scalar_lea.vmem [#allocation5], %s263
          %266 = dma.done %s261, 128
        $region48: #{tpu_custom_call.1} parent=43 // pred_fallthru
          _
      $region44: #{tpu_custom_call.1} parent=5 // pred_fallthru
        _
    $region6: #{tpu_custom_call.1} parent=1 // loop_footer
      %s19 = sadd.s32 1, %s15
    $region7: #{tpu_custom_call.1} parent=1 // loop_footer_branch
      %14 = sbr.rel target = $region3
    $region8: #{tpu_custom_call.1} parent=1 // loop_exit
      _
    %267 = vsyncpa [#allocation3], 1
    %s268 = scalar_lea.sflag [#allocation3], 1
    %269 = vsyncpa %s268, 1
    %270 = vsyncpa [#allocation4], 1
    %s271 = scalar_lea.sflag [#allocation4], 1
    %272 = vsyncpa %s271, 1

</llo_original>
